<compile_context>
chip_gen: v6e
topology: v6e:2x2x1
jax: 0.10.0
libtpu: 0.0.40
codegen_flags: <defaults>
</compile_context>

<pallas_src>
import jax
import jax.numpy as jnp
from jax.experimental import pallas as pl
from jax.experimental.pallas import tpu as pltpu


def _round_up(x: int, m: int) -> int:
    return ((x + m - 1) // m) * m


def _matmul_kernel(x_ref, w_ref, o_ref):
    """o[i,j] (+)= x[i,k] @ w_t[k,j]; o_ref is the resident f32 accumulator."""
    @pl.when(pl.program_id(2) == 0)
    def _():
        o_ref[...] = jnp.zeros_like(o_ref)

    o_ref[...] += jnp.dot(
        x_ref[...], w_ref[...], preferred_element_type=jnp.float32
    )


def linear_distributed_forward(
    data,
    weight,
    *,
    tm: int = 512,
    tn: int = 1024,
    tk: int = 1024,
    compute_dtype=None,
    force_pallas: bool = False,
):
    """Pallas equivalent of LinearDistributedModel.forward.

    data:   (M, K) float32   -- [batch, in_features]
    weight: (N, K) float32   -- stored parameter `self.weights` (= weights_original.T)
    returns (M, N) float32   == data @ weight.T == data @ weights_original
    """
    M, K = data.shape
    N, Kw = weight.shape
    assert K == Kw, "feature dims must match"

    # --- tiny-problem fast path: pad + launch + slice overhead dwarfs the math.
    if not force_pallas and (M * N * K) < (1 << 21):
        return jnp.dot(data, weight.T).astype(jnp.float32)

    # Optional bf16 compute (f32 accumulation); weight transposed ONCE here.
    if compute_dtype is not None:
        x_c = data.astype(compute_dtype)
        w_t = weight.T.astype(compute_dtype)          # (K, N)
    else:
        x_c = data
        w_t = weight.T                                # (K, N)

    itemsize = x_c.dtype.itemsize
    sub = 8 if itemsize == 4 else 16                  # sublane granularity

    # Clamp tiles to the (padded) problem; keep lane dims multiples of 128 and
    # sublane dims multiples of `sub`.
    tm = min(tm, _round_up(M, sub))
    tn = min(tn, _round_up(N, 128))
    tk = min(tk, _round_up(K, 128))

    Mp, Np, Kp = _round_up(M, tm), _round_up(N, tn), _round_up(K, tk)

    # Skinny-M heuristic: make sure the parallel (i, j) grid has >= 2 blocks
    # when possible so the 2nd TensorCore on v7x can take work.
    if Mp // tm == 1 and Np // tn == 1 and Np % 256 == 0:
        tn = Np // 2

    # Zero-pad: padded rows/cols contribute exactly zero, so slicing back is exact.
    x_p = x_c if (Mp == M and Kp == K) else jnp.pad(x_c, ((0, Mp - M), (0, Kp - K)))
    w_p = w_t if (Kp == K and Np == N) else jnp.pad(w_t, ((0, Kp - K), (0, Np - N)))

    grid_i, grid_j, grid_k = Mp // tm, Np // tn, Kp // tk
    grid = (grid_i, grid_j, grid_k)

    # Bytes include re-streaming: x is re-read per j-block, w per i-block.
    cost = pl.CostEstimate(
        flops=2 * Mp * Np * Kp,
        transcendentals=0,
        bytes_accessed=itemsize * (Mp * Kp * grid_j + Kp * Np * grid_i) + 4 * Mp * Np,
    )

    out_p = pl.pallas_call(
        _matmul_kernel,
        out_shape=jax.ShapeDtypeStruct((Mp, Np), jnp.float32),
        grid_spec=pltpu.PrefetchScalarGridSpec(
            num_scalar_prefetch=0,
            grid=grid,
            in_specs=[
                pl.BlockSpec((tm, tk), lambda i, j, k: (i, k)),  # x tile
                pl.BlockSpec((tk, tn), lambda i, j, k: (k, j)),  # w_t tile (K, N)
            ],
            out_specs=pl.BlockSpec((tm, tn), lambda i, j, k: (i, j)),
        ),
        compiler_params=pltpu.CompilerParams(
            dimension_semantics=("parallel", "parallel", "arbitrary"),
            vmem_limit_bytes=48 * 1024 * 1024,  # safe on v5e/v6e (128 MiB) and v7x (64 MiB)
        ),
        cost_estimate=cost,
    )(x_p, w_p)

    if Mp == M and Np == N:
        return out_p
    return out_p[:M, :N]


if __name__ == "__main__":
    key = jax.random.PRNGKey(0)
    k0, k1, k2, k3 = jax.random.split(key, 4)

    # --- 1) tiny, module-consistent shape (takes the non-Pallas fast path) ---
    batch, in_features, out_features = 8, 32, 16
    data_s = jax.random.normal(k0, (batch, in_features), dtype=jnp.float32)
    w_orig_s = jax.random.normal(k1, (in_features, out_features), dtype=jnp.float32)
    w_param_s = w_orig_s.T  # (out, in), as stored by the module
    out_s = jax.block_until_ready(linear_distributed_forward(data_s, w_param_s))
    ref_s = data_s @ w_orig_s
    assert out_s.shape == (batch, out_features)
    assert jnp.allclose(out_s, ref_s, atol=1e-4, rtol=1e-4)

    # --- 2) shape large enough to exercise the Pallas matmul path ---
    M, K, N = 128, 128, 256
    data_l = jax.random.normal(k2, (M, K), dtype=jnp.float32)
    w_orig_l = jax.random.normal(k3, (K, N), dtype=jnp.float32)
    w_param_l = w_orig_l.T  # (N, K)
    out_l = jax.block_until_ready(
        linear_distributed_forward(data_l, w_param_l, force_pallas=True)
    )
    ref_l = jnp.dot(data_l, w_orig_l, precision=jax.lax.Precision.HIGHEST)
    assert out_l.shape == (M, N)
    assert jnp.allclose(out_l, ref_l, atol=1e-3, rtol=1e-3)

    print("KERNEL_OK")
</pallas_src>

<mosaic_0001>
module attributes {stable_mosaic.version = 11 : i64} {
  func.func @_matmul_kernel(%arg0: i32, %arg1: i32, %arg2: i32, %arg3: memref<128x128xf32, #tpu.memory_space<vmem>>, %arg4: memref<128x128xf32, #tpu.memory_space<vmem>>, %arg5: memref<128x128xf32, #tpu.memory_space<vmem>>) attributes {dimension_semantics = [#tpu.dimension_semantics<parallel>, #tpu.dimension_semantics<parallel>, #tpu.dimension_semantics<arbitrary>], iteration_bounds = array<i64: 1, 2, 1>, scalar_prefetch = 0 : i64, scratch_operands = 0 : i64, tpu.core_type = #tpu.core_type<tc>, window_params = [{transform_indices = @transform_0, window_bounds = array<i64: 128, 128>}, {transform_indices = @transform_1, window_bounds = array<i64: 128, 128>}, {transform_indices = @transform_2, window_bounds = array<i64: 128, 128>}]} {
    %c0_i32 = arith.constant 0 : i32
    %0 = arith.cmpi eq, %arg2, %c0_i32 : i32
    %1 = arith.extui %0 : i1 to i32
    %c0_i32_0 = arith.constant 0 : i32
    %2 = arith.cmpi ne, %1, %c0_i32_0 : i32
    scf.if %2 {
      %cst_8 = arith.constant 0.000000e+00 : f32
      %9 = vector.broadcast %cst_8 : f32 to vector<128x128xf32>
      %c0_9 = arith.constant 0 : index
      %c0_10 = arith.constant 0 : index
      %10 = vector.load %arg5[%c0_9, %c0_10] : memref<128x128xf32, #tpu.memory_space<vmem>>, vector<128x128xf32>
      tpu.vector_store %arg5[%c0_9, %c0_10], %9 {strides = array<i32>} : memref<128x128xf32, #tpu.memory_space<vmem>>, vector<128x128xf32>,
    } else {
    }
    %c0 = arith.constant 0 : index
    %c0_1 = arith.constant 0 : index
    %3 = vector.load %arg5[%c0, %c0_1] : memref<128x128xf32, #tpu.memory_space<vmem>>, vector<128x128xf32>
    %c0_2 = arith.constant 0 : index
    %c0_3 = arith.constant 0 : index
    %4 = vector.load %arg3[%c0_2, %c0_3] : memref<128x128xf32, #tpu.memory_space<vmem>>, vector<128x128xf32>
    %c0_4 = arith.constant 0 : index
    %c0_5 = arith.constant 0 : index
    %5 = vector.load %arg4[%c0_4, %c0_5] : memref<128x128xf32, #tpu.memory_space<vmem>>, vector<128x128xf32>
    %cst = arith.constant dense<0.000000e+00> : vector<128x128xf32>
    %6 = tpu.matmul %4, %5, %cst {dimension_numbers = #tpu.dot_dimension_numbers<[1], [0], [0], [1], [0, 0, 1, 1], [], []>} : vector<128x128xf32>, vector<128x128xf32>, vector<128x128xf32> -> vector<128x128xf32>
    %7 = arith.addf %3, %6 : vector<128x128xf32>
    %c0_6 = arith.constant 0 : index
    %c0_7 = arith.constant 0 : index
    %8 = vector.load %arg5[%c0_6, %c0_7] : memref<128x128xf32, #tpu.memory_space<vmem>>, vector<128x128xf32>
    tpu.vector_store %arg5[%c0_6, %c0_7], %7 {strides = array<i32>} : memref<128x128xf32, #tpu.memory_space<vmem>>, vector<128x128xf32>,
    return
  }
  func.func @transform_0(%arg0: i32, %arg1: i32, %arg2: i32) -> (i32, i32) {
    %c0_i32 = arith.constant 0 : i32
    return %arg0, %arg2 : i32, i32
  }
  func.func @transform_1(%arg0: i32, %arg1: i32, %arg2: i32) -> (i32, i32) {
    %c0_i32 = arith.constant 0 : i32
    return %arg2, %arg1 : i32, i32
  }
  func.func @transform_2(%arg0: i32, %arg1: i32, %arg2: i32) -> (i32, i32) {
    %c0_i32 = arith.constant 0 : i32
    return %arg0, %arg1 : i32, i32
  }
}

</mosaic_0001>

<llo_original>
// kernel: tpu_custom_call.1
$region0: #{tpu_custom_call.1}
  #allocation0 [shape = 'u32[]', space=smem, size = 0x4, offset = 0x4, fixed_abs, tag = 'smem constant byte address 0x4 - core index']
  #allocation1 [shape = 'u32[144,128]{1,0:T(1,128)}', space=vmem, size = 0x12000, scoped, tag = 'internal scratch']
  %s0 = inlined_call_operand.hbm [shape: f32[128,128], index: 0, kind: input, shape index: {}]
  %s1 = inlined_call_operand.hbm [shape: f32[128,256], index: 1, kind: input, shape index: {}]
  %s2 = inlined_call_operand.hbm [shape: f32[128,256], index: 2, kind: output, shape index: {}]
  %s3 = sld [smem:[#allocation0]]
  $region53: #{tpu_custom_call.1} parent=0
    _
  %s5 = ssub.s32 1, %s3
  %s6 = scalar_select 0, %s5, %s3
  $region1: #{tpu_custom_call.1} parent=0
    #allocation2 [shape = 'u8[65536]{0}', space=vmem, size = 0x10000, scoped, tag = 'input window, operand 0, single buffered']
    #allocation3 [shape = 's32[2]{0}', space=sflag, size = 0x8, scoped, tag = 'scoped memory for tpu_custom_call.1']
    #allocation4 [shape = 's32[2]{0}', space=sflag, size = 0x8, scoped, tag = 'scoped memory for tpu_custom_call.1']
    #allocation5 [shape = 'u8[131072]{0}', space=vmem, size = 0x20000, scoped, tag = 'input window, operand 1']
    #allocation6 [shape = 's32[2]{0}', space=sflag, size = 0x8, scoped, tag = 'scoped memory for tpu_custom_call.1']
    #allocation7 [shape = 'u8[131072]{0}', space=vmem, size = 0x20000, scoped, tag = 'output window, operand 0']
    %7 = vsyncpa [#allocation3], 0
    %8 = vsyncpa [#allocation6], 0
    %s9 = scalar_lea.sflag [#allocation6], 1
    %10 = vsyncpa %s9, 0
    %11 = vsyncpa [#allocation4], 0
    %s12 = scalar_lea.sflag [#allocation4], 1
    %13 = vsyncpa %s12, 0
    loop: start=0, step=1, limit=4
    $region2: #{tpu_custom_call.1} parent=1 // loop_pre_header
      _
    $region3: #{tpu_custom_call.1} parent=1 // loop_header
      %s15 = sphi 0, %s19
      %p16 = scmp.ge.s32.totalorder %s15, 4
      %s22 = sphi 0, %s41
      %s23 = sphi 0, %s37
      %s24 = sphi 0, %s33
      %s25 = sphi 0, %s22
      %s26 = sphi 0, %s23
      %s27 = sphi 0, %s24
      %s28 = sphi 0, %s25
      %s29 = sphi 0, %s26
      %s30 = sphi 0, %s27
      %s46 = sphi 0, %s48
      %s49 = sphi 0, %s46
      %s50 = sphi 0, %s49
      %s66 = sphi 0, %s50
      %s74 = sphi 0, %s76
      %s77 = sphi 0, %s74
      %s78 = sphi 0, %s77
      %s94 = sphi 0, %s78
      %s102 = sphi 0, %s104
      %s105 = sphi 0, %s102
      %s106 = sphi 0, %s105
      %s122 = sphi 0, %s106
    $region4: #{tpu_custom_call.1} parent=1 // loop_header_branch
      %18 = sbr.rel (%p16) target = $region8
    $region5: #{tpu_custom_call.1} parent=1 // loop_body
      %s20 = ssub.s32 %s15, 1
      %s21 = ssub.s32 %s15, 2
      %s31 = sadd.s32 1, %s24
      %p32 = scmp.ge.s32.totalorder %s31, 1
      %s33 = scalar_select %p32, 0, %s31
      %s34 = sadd.s32 1, %s23
      %s35 = scalar_select %p32, %s34, %s23
      %p36 = scmp.ge.s32.totalorder %s35, 2
      %s37 = scalar_select %p36, 0, %s35
      %s38 = sadd.s32 1, %s22
      %s39 = scalar_select %p36, %s38, %s22
      %p40 = scmp.ge.s32.totalorder %s39, 1
      %s41 = scalar_select %p40, 0, %s39
      %s42 = ssub.s32 %s22, %s41
      %s43 = ssub.s32 %s24, %s33
      %s44 = sor.u32 %s42, %s43
      %p45 = scmp.eq.s32.totalorder %s44, 0
      %s47 = sadd.s32 %s46, 1
      %s48 = scalar_select %p45, %s46, %s47
      %p51 = pneg %p45
      %p52 = scmp.eq.s32.totalorder %s15, 1
      %p53 = por %p51, %p52
      %p54 = scmp.ne.s32.totalorder %s46, %s49
      %p55 = scmp.eq.s32.totalorder %s15, 0
      %p56 = por %p54, %p55
      %p57 = scmp.ne.s32.totalorder %s46, %s49
      %p58 = scmp.eq.s32.totalorder %s20, 1
      %p59 = por %p57, %p58
      %p60 = scmp.ne.s32.totalorder %s49, %s50
      %p61 = scmp.eq.s32.totalorder %s20, 0
      %p62 = por %p60, %p61
      %p63 = scmp.ne.s32.totalorder %s49, %s50
      %p64 = scmp.eq.s32.totalorder %s21, 1
      %p65 = por %p63, %p64
      %p67 = scmp.ne.s32.totalorder %s50, %s66
      %p68 = scmp.eq.s32.totalorder %s21, 0
      %p69 = por %p67, %p68
      %s70 = ssub.s32 %s24, %s33
      %s71 = ssub.s32 %s23, %s37
      %s72 = sor.u32 %s70, %s71
      %p73 = scmp.eq.s32.totalorder %s72, 0
      %s75 = sadd.s32 %s74, 1
      %s76 = scalar_select %p73, %s74, %s75
      %p79 = pneg %p73
      %p80 = scmp.eq.s32.totalorder %s15, 1
      %p81 = por %p79, %p80
      %p82 = scmp.ne.s32.totalorder %s74, %s77
      %p83 = scmp.eq.s32.totalorder %s15, 0
      %p84 = por %p82, %p83
      %p85 = scmp.ne.s32.totalorder %s74, %s77
      %p86 = scmp.eq.s32.totalorder %s20, 1
      %p87 = por %p85, %p86
      %p88 = scmp.ne.s32.totalorder %s77, %s78
      %p89 = scmp.eq.s32.totalorder %s20, 0
      %p90 = por %p88, %p89
      %p91 = scmp.ne.s32.totalorder %s77, %s78
      %p92 = scmp.eq.s32.totalorder %s21, 1
      %p93 = por %p91, %p92
      %p95 = scmp.ne.s32.totalorder %s78, %s94
      %p96 = scmp.eq.s32.totalorder %s21, 0
      %p97 = por %p95, %p96
      %s98 = ssub.s32 %s22, %s41
      %s99 = ssub.s32 %s23, %s37
      %s100 = sor.u32 %s98, %s99
      %p101 = scmp.eq.s32.totalorder %s100, 0
      %s103 = sadd.s32 %s102, 1
      %s104 = scalar_select %p101, %s102, %s103
      %p107 = pneg %p101
      %p108 = scmp.eq.s32.totalorder %s15, 1
      %p109 = por %p107, %p108
      %p110 = scmp.ne.s32.totalorder %s102, %s105
      %p111 = scmp.eq.s32.totalorder %s15, 0
      %p112 = por %p110, %p111
      %p113 = scmp.ne.s32.totalorder %s102, %s105
      %p114 = scmp.eq.s32.totalorder %s20, 1
      %p115 = por %p113, %p114
      %p116 = scmp.ne.s32.totalorder %s105, %s106
      %p117 = scmp.eq.s32.totalorder %s20, 0
      %p118 = por %p116, %p117
      %p119 = scmp.ne.s32.totalorder %s105, %s106
      %p120 = scmp.eq.s32.totalorder %s21, 1
      %p121 = por %p119, %p120
      %p123 = scmp.ne.s32.totalorder %s106, %s122
      %p124 = scmp.eq.s32.totalorder %s21, 0
      %p125 = por %p123, %p124
      %p126 = scmp.le.s32.totalorder 1, %s15
      %p127 = scmp.lt.s32.totalorder %s15, 3
      %p128 = pnand %p126, %p127
      %p129 = pneg %p128
      // Predicated region
      $region9: #{tpu_custom_call.1} parent=5 // pred_check
        _
      $region10: #{tpu_custom_call.1} parent=5 // pred_check_branch
        %131 = sbr.rel (%p128) target = $region12
      $region11: #{tpu_custom_call.1} parent=5 // pred_region
        %s132 = ssub.s32 %s15, 1
        // Predicated region
        $region13: #{tpu_custom_call.1} parent=11 // pred_check
          %p133 = pneg %p62
        $region14: #{tpu_custom_call.1} parent=11 // pred_check_branch
          %135 = sbr.rel (%p133) target = $region16
        $region15: #{tpu_custom_call.1} parent=11 // pred_region
          %s136 = smul.u32 16, %s25
          %s138 = ssub.s32 2048, 2048
          %139 = vsyncadd [#allocation3], %s138
          %s140 = sadd.s32 %s27, %s136
          %s141 = smul.addr %s140, 128
          %s142 = scalar_lea.hbm %s0, %s141
          %s143 = sshll.u32 [#allocation2], 4
          %s144 = int_to_ptr.vmem [resolvable:$true] %s143
          %149 = dma.hbm_to_vmem [thread:$0]  %s142, 2048, %s144, [#allocation3], 128, 128, 8
        $region16: #{tpu_custom_call.1} parent=11 // pred_fallthru
          _
      $region12: #{tpu_custom_call.1} parent=5 // pred_fallthru
        _
      %p150 = scmp.lt.s32.totalorder %s15, 2
      // Predicated region
      $region17: #{tpu_custom_call.1} parent=5 // pred_check
        %p151 = pneg %p150
      $region18: #{tpu_custom_call.1} parent=5 // pred_check_branch
        %153 = sbr.rel (%p151) target = $region20
      $region19: #{tpu_custom_call.1} parent=5 // pred_region
        // Predicated region
        $region21: #{tpu_custom_call.1} parent=19 // pred_check
          %p154 = pneg %p84
        $region22: #{tpu_custom_call.1} parent=19 // pred_check_branch
          %156 = sbr.rel (%p154) target = $region24
        $region23: #{tpu_custom_call.1} parent=19 // pred_region
          %s157 = sand.u32 %s74, 1
          %s158 = scalar_lea.sflag [#allocation6], %s157
          %s159 = sand.u32 %s74, 1
          %s160 = smul.addr %s159, 128
          %s161 = scalar_lea.vmem [#allocation5], %s160
          %s162 = smul.u32 16, %s24
          %s164 = ssub.s32 2048, 2048
          %165 = vsyncadd %s158, %s164
          %s166 = smul.addr %s162, 2
          %s167 = sadd.s32 %s23, %s166
          %s168 = smul.addr %s167, 128
          %s169 = scalar_lea.hbm %s1, %s168
          %s170 = sshll.u32 %s161, 4
          %s171 = int_to_ptr.vmem [resolvable:$true] %s170
          %176 = dma.hbm_to_vmem [thread:$0]  %s169, 2048, %s171, %s158, 256, 128, 8
        $region24: #{tpu_custom_call.1} parent=19 // pred_fallthru
          _
      $region20: #{tpu_custom_call.1} parent=5 // pred_fallthru
        _
      %p177 = scmp.le.s32.totalorder 1, %s15
      %p178 = scmp.lt.s32.totalorder %s15, 3
      %p179 = pnand %p177, %p178
      %p180 = pneg %p179
      // Predicated region
      $region25: #{tpu_custom_call.1} parent=5 // pred_check
        _
      $region26: #{tpu_custom_call.1} parent=5 // pred_check_branch
        %182 = sbr.rel (%p179) target = $region28
      $region27: #{tpu_custom_call.1} parent=5 // pred_region
        %s183 = ssub.s32 %s15, 1
        // Predicated region
        $region29: #{tpu_custom_call.1} parent=27 // pred_check
          %p184 = pneg %p62
        $region30: #{tpu_custom_call.1} parent=27 // pred_check_branch
          %186 = sbr.rel (%p184) target = $region32
        $region31: #{tpu_custom_call.1} parent=27 // pred_region
          %187 = dma.done [#allocation3], 2048
        $region32: #{tpu_custom_call.1} parent=27 // pred_fallthru
          _
        %s188 = sand.u32 %s77, 1
        %s189 = scalar_lea.sflag [#allocation6], %s188
        %s190 = sand.u32 %s77, 1
        %s191 = smul.addr %s190, 128
        %s192 = scalar_lea.vmem [#allocation5], %s191
        // Predicated region
        $region33: #{tpu_custom_call.1} parent=27 // pred_check
          %p193 = pneg %p90
        $region34: #{tpu_custom_call.1} parent=27 // pred_check_branch
          %195 = sbr.rel (%p193) target = $region36
        $region35: #{tpu_custom_call.1} parent=27 // pred_region
          %196 = dma.done %s189, 2048
        $region36: #{tpu_custom_call.1} parent=27 // pred_fallthru
          _
        %p197 = pneg %p62
        %p198 = pneg %p59
        %s199 = sand.u32 %s77, 1
        %s200 = scalar_lea.sflag [#allocation6], %s199
        %s201 = sand.u32 %s77, 1
        %s202 = smul.addr %s201, 128
        %s203 = scalar_lea.vmem [#allocation5], %s202
        %p204 = pneg %p90
        %p205 = pneg %p87
        %p206 = pneg %p118
        %p207 = pneg %p115
        %s208 = sand.u32 %s105, 1
        %s209 = scalar_lea.sflag [#allocation4], %s208
        %s210 = sand.u32 %s105, 1
        %s211 = smul.addr %s210, 128
        %s212 = scalar_lea.vmem [#allocation7], %s211
        %s213 = smul.u32 16, %s25
        %s214 = smul.u32 16, %s27
        %s215 = smul.u32 16, %s25
        %p216 = scmp.eq.s32.totalorder %s27, 0
        // Predicated region
        $region37: #{tpu_custom_call.1} parent=27 // pred_check
          %p217 = pneg %p216
        $region38: #{tpu_custom_call.1} parent=27 // pred_check_branch
          %219 = sbr.rel (%p217) target = $region40
        $region39: #{tpu_custom_call.1} parent=27 // pred_region
          %220 = vst [vmem:[%s212] sm:$0xff] 0.0
          %221 = vst [vmem:[%s212 + $0x8] sm:$0xff] 0.0
          %222 = vst [vmem:[%s212 + $0x10] sm:$0xff] 0.0
          %223 = vst [vmem:[%s212 + $0x18] sm:$0xff] 0.0
          %224 = vst [vmem:[%s212 + $0x20] sm:$0xff] 0.0
          %225 = vst [vmem:[%s212 + $0x28] sm:$0xff] 0.0
          %226 = vst [vmem:[%s212 + $0x30] sm:$0xff] 0.0
          %227 = vst [vmem:[%s212 + $0x38] sm:$0xff] 0.0
          %228 = vst [vmem:[%s212 + $0x40] sm:$0xff] 0.0
          %229 = vst [vmem:[%s212 + $0x48] sm:$0xff] 0.0
          %230 = vst [vmem:[%s212 + $0x50] sm:$0xff] 0.0
          %231 = vst [vmem:[%s212 + $0x58] sm:$0xff] 0.0
          %232 = vst [vmem:[%s212 + $0x60] sm:$0xff] 0.0
          %233 = vst [vmem:[%s212 + $0x68] sm:$0xff] 0.0
          %234 = vst [vmem:[%s212 + $0x70] sm:$0xff] 0.0
          %235 = vst [vmem:[%s212 + $0x78] sm:$0xff] 0.0
        $region40: #{tpu_custom_call.1} parent=27 // pred_fallthru
          _
        %v236 = vld [vmem:[%s212] sm:$0xff]
        %v237 = vld [vmem:[%s212 + $0x8] sm:$0xff]
        %v238 = vld [vmem:[%s212 + $0x10] sm:$0xff]
        %v239 = vld [vmem:[%s212 + $0x18] sm:$0xff]
        %v240 = vld [vmem:[%s212 + $0x20] sm:$0xff]
        %v241 = vld [vmem:[%s212 + $0x28] sm:$0xff]
        %v242 = vld [vmem:[%s212 + $0x30] sm:$0xff]
        %v243 = vld [vmem:[%s212 + $0x38] sm:$0xff]
        %v244 = vld [vmem:[%s212 + $0x40] sm:$0xff]
        %v245 = vld [vmem:[%s212 + $0x48] sm:$0xff]
        %v246 = vld [vmem:[%s212 + $0x50] sm:$0xff]
        %v247 = vld [vmem:[%s212 + $0x58] sm:$0xff]
        %v248 = vld [vmem:[%s212 + $0x60] sm:$0xff]
        %v249 = vld [vmem:[%s212 + $0x68] sm:$0xff]
        %v250 = vld [vmem:[%s212 + $0x70] sm:$0xff]
        %v251 = vld [vmem:[%s212 + $0x78] sm:$0xff]
        %v252 = vld [vmem:[#allocation2] sm:$0xff]
        %v253 = vld [vmem:[#allocation2 + $0x8] sm:$0xff]
        %v254 = vld [vmem:[#allocation2 + $0x10] sm:$0xff]
        %v255 = vld [vmem:[#allocation2 + $0x18] sm:$0xff]
        %v256 = vld [vmem:[#allocation2 + $0x20] sm:$0xff]
        %v257 = vld [vmem:[#allocation2 + $0x28] sm:$0xff]
        %v258 = vld [vmem:[#allocation2 + $0x30] sm:$0xff]
        %v259 = vld [vmem:[#allocation2 + $0x38] sm:$0xff]
        %v260 = vld [vmem:[#allocation2 + $0x40] sm:$0xff]
        %v261 = vld [vmem:[#allocation2 + $0x48] sm:$0xff]
        %v262 = vld [vmem:[#allocation2 + $0x50] sm:$0xff]
        %v263 = vld [vmem:[#allocation2 + $0x58] sm:$0xff]
        %v264 = vld [vmem:[#allocation2 + $0x60] sm:$0xff]
        %v265 = vld [vmem:[#allocation2 + $0x68] sm:$0xff]
        %v266 = vld [vmem:[#allocation2 + $0x70] sm:$0xff]
        %v267 = vld [vmem:[#allocation2 + $0x78] sm:$0xff]
        %v268 = vld [vmem:[%s192] sm:$0xff]
        %v269 = vld [vmem:[%s192 + $0x8] sm:$0xff]
        %v270 = vld [vmem:[%s192 + $0x10] sm:$0xff]
        %v271 = vld [vmem:[%s192 + $0x18] sm:$0xff]
        %v272 = vld [vmem:[%s192 + $0x20] sm:$0xff]
        %v273 = vld [vmem:[%s192 + $0x28] sm:$0xff]
        %v274 = vld [vmem:[%s192 + $0x30] sm:$0xff]
        %v275 = vld [vmem:[%s192 + $0x38] sm:$0xff]
        %v276 = vld [vmem:[%s192 + $0x40] sm:$0xff]
        %v277 = vld [vmem:[%s192 + $0x48] sm:$0xff]
        %v278 = vld [vmem:[%s192 + $0x50] sm:$0xff]
        %v279 = vld [vmem:[%s192 + $0x58] sm:$0xff]
        %v280 = vld [vmem:[%s192 + $0x60] sm:$0xff]
        %v281 = vld [vmem:[%s192 + $0x68] sm:$0xff]
        %v282 = vld [vmem:[%s192 + $0x70] sm:$0xff]
        %v283 = vld [vmem:[%s192 + $0x78] sm:$0xff]
        %284 = vmatprep.subr.mxu0 0.0
        %285 = vmatpush1.msra.mxu0 %v283
        %286 = vmatprep.subr.mxu0 0.0
        %287 = vmatpush1.msra.mxu0 %v282
        %288 = vmatprep.subr.mxu0 0.0
        %289 = vmatpush1.msra.mxu0 %v281
        %290 = vmatprep.subr.mxu0 0.0
        %291 = vmatpush1.msra.mxu0 %v280
        %292 = vmatprep.subr.mxu0 0.0
        %293 = vmatpush1.msra.mxu0 %v279
        %294 = vmatprep.subr.mxu0 0.0
        %295 = vmatpush1.msra.mxu0 %v278
        %296 = vmatprep.subr.mxu0 0.0
        %297 = vmatpush1.msra.mxu0 %v277
        %298 = vmatprep.subr.mxu0 0.0
        %299 = vmatpush1.msra.mxu0 %v276
        %300 = vmatprep.subr.mxu0 0.0
        %301 = vmatpush1.msra.mxu0 %v275
        %302 = vmatprep.subr.mxu0 0.0
        %303 = vmatpush1.msra.mxu0 %v274
        %304 = vmatprep.subr.mxu0 0.0
        %305 = vmatpush1.msra.mxu0 %v273
        %306 = vmatprep.subr.mxu0 0.0
        %307 = vmatpush1.msra.mxu0 %v272
        %308 = vmatprep.subr.mxu0 0.0
        %309 = vmatpush1.msra.mxu0 %v271
        %310 = vmatprep.subr.mxu0 0.0
        %311 = vmatpush1.msra.mxu0 %v270
        %312 = vmatprep.subr.mxu0 0.0
        %313 = vmatpush1.msra.mxu0 %v269
        %314 = vmatprep.subr.mxu0 0.0
        %315 = vmatpush1.msra.mxu0 %v268
        %316 = vmatprep.subr.mxu0 0.0
        %317 = vmatpush2.msra.mxu0 0.0
        %318 = vmatprep.subr.mxu0 0.0
        %319 = vmatpush2.msra.mxu0 0.0
        %320 = vmatprep.subr.mxu0 0.0
        %321 = vmatpush2.msra.mxu0 0.0
        %322 = vmatprep.subr.mxu0 0.0
        %323 = vmatpush2.msra.mxu0 0.0
        %324 = vmatprep.subr.mxu0 0.0
        %325 = vmatpush2.msra.mxu0 0.0
        %326 = vmatprep.subr.mxu0 0.0
        %327 = vmatpush2.msra.mxu0 0.0
        %328 = vmatprep.subr.mxu0 0.0
        %329 = vmatpush2.msra.mxu0 0.0
        %330 = vmatprep.subr.mxu0 0.0
        %331 = vmatpush2.msra.mxu0 0.0
        %332 = vmatprep.subr.mxu0 0.0
        %333 = vmatpush2.msra.mxu0 0.0
        %334 = vmatprep.subr.mxu0 0.0
        %335 = vmatpush2.msra.mxu0 0.0
        %336 = vmatprep.subr.mxu0 0.0
        %337 = vmatpush2.msra.mxu0 0.0
        %338 = vmatprep.subr.mxu0 0.0
        %339 = vmatpush2.msra.mxu0 0.0
        %340 = vmatprep.subr.mxu0 0.0
        %341 = vmatpush2.msra.mxu0 0.0
        %342 = vmatprep.subr.mxu0 0.0
        %343 = vmatpush2.msra.mxu0 0.0
        %344 = vmatprep.subr.mxu0 0.0
        %345 = vmatpush2.msra.mxu0 0.0
        %346 = vmatprep.subr.mxu0 0.0
        %347 = vmatpush2.msra.mxu0 0.0
        %348 = vmatprep.mubr.f32.mxu0 0.0
        %349 = vmatmul.mubr.f32.gmra.mxu0 %v252
        %v350 = vpop.f32.mrf.mxu0
        %v351 = vadd.f32 0.0, %v350
        %v352 = vpop.f32.mrf.mxu0
        %353 = vmatprep.mubr.f32.mxu0 0.0
        %354 = vmatmul.mubr.f32.gmra.mxu0 %v253
        %v355 = vpop.f32.mrf.mxu0
        %v356 = vadd.f32 0.0, %v355
        %v357 = vpop.f32.mrf.mxu0
        %358 = vmatprep.mubr.f32.mxu0 0.0
        %359 = vmatmul.mubr.f32.gmra.mxu0 %v254
        %v360 = vpop.f32.mrf.mxu0
        %v361 = vadd.f32 0.0, %v360
        %v362 = vpop.f32.mrf.mxu0
        %363 = vmatprep.mubr.f32.mxu0 0.0
        %364 = vmatmul.mubr.f32.gmra.mxu0 %v255
        %v365 = vpop.f32.mrf.mxu0
        %v366 = vadd.f32 0.0, %v365
        %v367 = vpop.f32.mrf.mxu0
        %368 = vmatprep.mubr.f32.mxu0 0.0
        %369 = vmatmul.mubr.f32.gmra.mxu0 %v256
        %v370 = vpop.f32.mrf.mxu0
        %v371 = vadd.f32 0.0, %v370
        %v372 = vpop.f32.mrf.mxu0
        %373 = vmatprep.mubr.f32.mxu0 0.0
        %374 = vmatmul.mubr.f32.gmra.mxu0 %v257
        %v375 = vpop.f32.mrf.mxu0
        %v376 = vadd.f32 0.0, %v375
        %v377 = vpop.f32.mrf.mxu0
        %378 = vmatprep.mubr.f32.mxu0 0.0
        %379 = vmatmul.mubr.f32.gmra.mxu0 %v258
        %v380 = vpop.f32.mrf.mxu0
        %v381 = vadd.f32 0.0, %v380
        %v382 = vpop.f32.mrf.mxu0
        %383 = vmatprep.mubr.f32.mxu0 0.0
        %384 = vmatmul.mubr.f32.gmra.mxu0 %v259
        %v385 = vpop.f32.mrf.mxu0
        %v386 = vadd.f32 0.0, %v385
        %v387 = vpop.f32.mrf.mxu0
        %388 = vmatprep.mubr.f32.mxu0 0.0
        %389 = vmatmul.mubr.f32.gmra.mxu0 %v260
        %v390 = vpop.f32.mrf.mxu0
        %v391 = vadd.f32 0.0, %v390
        %v392 = vpop.f32.mrf.mxu0
        %393 = vmatprep.mubr.f32.mxu0 0.0
        %394 = vmatmul.mubr.f32.gmra.mxu0 %v261
        %v395 = vpop.f32.mrf.mxu0
        %v396 = vadd.f32 0.0, %v395
        %v397 = vpop.f32.mrf.mxu0
        %398 = vmatprep.mubr.f32.mxu0 0.0
        %399 = vmatmul.mubr.f32.gmra.mxu0 %v262
        %v400 = vpop.f32.mrf.mxu0
        %v401 = vadd.f32 0.0, %v400
        %v402 = vpop.f32.mrf.mxu0
        %403 = vmatprep.mubr.f32.mxu0 0.0
        %404 = vmatmul.mubr.f32.gmra.mxu0 %v263
        %v405 = vpop.f32.mrf.mxu0
        %v406 = vadd.f32 0.0, %v405
        %v407 = vpop.f32.mrf.mxu0
        %408 = vmatprep.mubr.f32.mxu0 0.0
        %409 = vmatmul.mubr.f32.gmra.mxu0 %v264
        %v410 = vpop.f32.mrf.mxu0
        %v411 = vadd.f32 0.0, %v410
        %v412 = vpop.f32.mrf.mxu0
        %413 = vmatprep.mubr.f32.mxu0 0.0
        %414 = vmatmul.mubr.f32.gmra.mxu0 %v265
        %v415 = vpop.f32.mrf.mxu0
        %v416 = vadd.f32 0.0, %v415
        %v417 = vpop.f32.mrf.mxu0
        %418 = vmatprep.mubr.f32.mxu0 0.0
        %419 = vmatmul.mubr.f32.gmra.mxu0 %v266
        %v420 = vpop.f32.mrf.mxu0
        %v421 = vadd.f32 0.0, %v420
        %v422 = vpop.f32.mrf.mxu0
        %423 = vmatprep.mubr.f32.mxu0 0.0
        %424 = vmatmul.mubr.f32.gmra.mxu0 %v267
        %v425 = vpop.f32.mrf.mxu0
        %v426 = vadd.f32 0.0, %v425
        %v427 = vpop.f32.mrf.mxu0
        %428 = vdwg.mxu0
        %v429 = vadd.f32 %v236, %v351
        %v430 = vadd.f32 %v237, %v356
        %v431 = vadd.f32 %v238, %v361
        %v432 = vadd.f32 %v239, %v366
        %v433 = vadd.f32 %v240, %v371
        %v434 = vadd.f32 %v241, %v376
        %v435 = vadd.f32 %v242, %v381
        %v436 = vadd.f32 %v243, %v386
        %v437 = vadd.f32 %v244, %v391
        %v438 = vadd.f32 %v245, %v396
        %v439 = vadd.f32 %v246, %v401
        %v440 = vadd.f32 %v247, %v406
        %v441 = vadd.f32 %v248, %v411
        %v442 = vadd.f32 %v249, %v416
        %v443 = vadd.f32 %v250, %v421
        %v444 = vadd.f32 %v251, %v426
        %445 = vst [vmem:[%s212] sm:$0xff] %v429
        %446 = vst [vmem:[%s212 + $0x8] sm:$0xff] %v430
        %447 = vst [vmem:[%s212 + $0x10] sm:$0xff] %v431
        %448 = vst [vmem:[%s212 + $0x18] sm:$0xff] %v432
        %449 = vst [vmem:[%s212 + $0x20] sm:$0xff] %v433
        %450 = vst [vmem:[%s212 + $0x28] sm:$0xff] %v434
        %451 = vst [vmem:[%s212 + $0x30] sm:$0xff] %v435
        %452 = vst [vmem:[%s212 + $0x38] sm:$0xff] %v436
        %453 = vst [vmem:[%s212 + $0x40] sm:$0xff] %v437
        %454 = vst [vmem:[%s212 + $0x48] sm:$0xff] %v438
        %455 = vst [vmem:[%s212 + $0x50] sm:$0xff] %v439
        %456 = vst [vmem:[%s212 + $0x58] sm:$0xff] %v440
        %457 = vst [vmem:[%s212 + $0x60] sm:$0xff] %v441
        %458 = vst [vmem:[%s212 + $0x68] sm:$0xff] %v442
        %459 = vst [vmem:[%s212 + $0x70] sm:$0xff] %v443
        %460 = vst [vmem:[%s212 + $0x78] sm:$0xff] %v444
        %s461 = sand.u32 %s105, 1
        %s462 = scalar_lea.sflag [#allocation4], %s461
        %s463 = sand.u32 %s105, 1
        %s464 = smul.addr %s463, 128
        %s465 = scalar_lea.vmem [#allocation7], %s464
        // Predicated region
        $region41: #{tpu_custom_call.1} parent=27 // pred_check
          %p466 = pneg %p115
        $region42: #{tpu_custom_call.1} parent=27 // pred_check_branch
          %468 = sbr.rel (%p466) target = $region44
        $region43: #{tpu_custom_call.1} parent=27 // pred_region
          %s469 = smul.u32 16, %s25
          %s471 = ssub.s32 2048, 2048
          %472 = vsyncadd %s462, %s471
          %s473 = smul.addr %s469, 2
          %s474 = sadd.s32 %s26, %s473
          %s475 = smul.addr %s474, 128
          %s476 = scalar_lea.hbm %s2, %s475
          %s477 = sshll.u32 %s465, 4
          %s478 = int_to_ptr.vmem [resolvable:$true] %s477
          %483 = dma.vmem_to_hbm [thread:$0]  %s478, 2048, %s476, %s462, 128, 256, 8
        $region44: #{tpu_custom_call.1} parent=27 // pred_fallthru
          _
      $region28: #{tpu_custom_call.1} parent=5 // pred_fallthru
        _
      %p484 = scmp.le.s32.totalorder 2, %s15
      // Predicated region
      $region45: #{tpu_custom_call.1} parent=5 // pred_check
        %p485 = pneg %p484
      $region46: #{tpu_custom_call.1} parent=5 // pred_check_branch
        %487 = sbr.rel (%p485) target = $region48
      $region47: #{tpu_custom_call.1} parent=5 // pred_region
        %s488 = ssub.s32 %s15, 2
        // Predicated region
        $region49: #{tpu_custom_call.1} parent=47 // pred_check
          %p489 = pneg %p121
        $region50: #{tpu_custom_call.1} parent=47 // pred_check_branch
          %491 = sbr.rel (%p489) target = $region52
        $region51: #{tpu_custom_call.1} parent=47 // pred_region
          %s492 = sand.u32 %s106, 1
          %s493 = scalar_lea.sflag [#allocation4], %s492
          %s494 = sand.u32 %s106, 1
          %s495 = smul.addr %s494, 128
          %s496 = scalar_lea.vmem [#allocation7], %s495
          %497 = dma.done %s493, 2048
        $region52: #{tpu_custom_call.1} parent=47 // pred_fallthru
          _
      $region48: #{tpu_custom_call.1} parent=5 // pred_fallthru
        _
    $region6: #{tpu_custom_call.1} parent=1 // loop_footer
      %s19 = sadd.s32 1, %s15
    $region7: #{tpu_custom_call.1} parent=1 // loop_footer_branch
      %14 = sbr.rel target = $region3
    $region8: #{tpu_custom_call.1} parent=1 // loop_exit
      _
    %498 = vsyncpa [#allocation3], 1
    %s499 = scalar_lea.sflag [#allocation3], 1
    %500 = vsyncpa %s499, 1
    %501 = vsyncpa [#allocation6], 1
    %s502 = scalar_lea.sflag [#allocation6], 1
    %503 = vsyncpa %s502, 1
    %504 = vsyncpa [#allocation4], 1
    %s505 = scalar_lea.sflag [#allocation4], 1
    %506 = vsyncpa %s505, 1

</llo_original>
